<compile_context>
chip_gen: v7x
topology: tpu7x:2x2x1
jax: 0.10.0
libtpu: 0.0.40
codegen_flags: <defaults>
</compile_context>

<pallas_src>
import math

import jax
import jax.numpy as jnp
import numpy as np
from jax import lax
from jax.experimental import pallas as pl
from jax.experimental.pallas import tpu as pltpu

_TB_MAX = 512     # max batch rows per grid step (multiple of 8)
_OUT_LANES = 8    # packed output width (cols 0/1/2 used; rest zero)


def _round_up(x, m):
    return -(-x // m) * m


def _choose_tb(b8, tb_max=_TB_MAX):
    """Pick batch tile: multiple of 8, <= b8, and >= 2 grid steps when possible."""
    if b8 <= 8:
        return 8
    # aim for at least 2 grid steps so v7x's two TensorCores both get work
    return min(tb_max, _round_up(-(-b8 // 2), 8))


def ensemble_kernel(x_ref, we_ref, be_ref, wdf_ref, bdf_ref, scal_ref, out_ref):
    d = x_ref.shape[1]      # flattened feature dim (static)
    tb = x_ref.shape[0]

    x = x_ref[...]                              # [TB, D] f32 (true input)
    x_bf = x.astype(jnp.bfloat16)               # MXU operand only

    # ---- autoencoder -----------------------------------------------------
    z = jnp.tanh(
        jnp.dot(x_bf, we_ref[...], preferred_element_type=jnp.float32)
        + be_ref[...])                                            # [TB, Hlat] f32

    # fused decoder + flow matmul:  z @ [Wd | Wf]  -> [TB, D + Hlat]
    zw = (jnp.dot(z.astype(jnp.bfloat16), wdf_ref[...],
                  preferred_element_type=jnp.float32)
          + bdf_ref[...])
    x_rec = zw[:, :d]                                             # [TB, D]
    y = zw[:, d:]                                                 # [TB, Hlat]

    # ae_score = mean over flattened (C, H, W), f32 reduction on VPU/XLU
    diff = x - x_rec
    ae_score = jnp.sum(diff * diff, axis=1, keepdims=True) * (1.0 / d)  # [TB,1]

    # ---- flow log-prob ----------------------------------------------------
    h_dim = y.shape[1]
    logdet = scal_ref[0]
    w_ae = scal_ref[1]
    w_flow = scal_ref[2]
    log2pi = scal_ref[3]
    yy = jnp.sum(y * y, axis=1, keepdims=True)                    # [TB, 1]
    flow_score = 0.5 * yy + 0.5 * h_dim * log2pi - logdet         # = -logprob

    # ---- ensemble ---------------------------------------------------------
    ens_score = w_ae * ae_score + w_flow * flow_score

    # small packed output: col 0 = ae, col 1 = flow, col 2 = ensemble
    col = lax.broadcasted_iota(jnp.int32, (tb, _OUT_LANES), 1)
    out_ref[...] = jnp.where(col == 0, ae_score,
                             jnp.where(col == 1, flow_score,
                                       jnp.where(col == 2, ens_score, 0.0)))


def prepare_ensemble_params(params):
    """One-time weight preprocessing (hoisted out of the per-batch call path)."""
    we, be, wd, bd, wf, bf = params
    we_bf = we.astype(jnp.bfloat16)                                   # [D, Hlat]
    wdf_bf = jnp.concatenate([wd, wf], axis=1).astype(jnp.bfloat16)   # [Hlat, D+Hlat]
    be2 = be.reshape(1, -1).astype(jnp.float32)
    bdf = jnp.concatenate([bd, bf]).reshape(1, -1).astype(jnp.float32)
    # log|det Wf| for the linear flow (glue, computed once in plain JAX).
    _, logdet = jnp.linalg.slogdet(wf.astype(jnp.float32))
    return we_bf, be2, wdf_bf, bdf, logdet.astype(jnp.float32)


def ensemble_forward(x_nchw, prepared, w_ae=0.5, w_flow=0.5, tb_max=_TB_MAX):
    """Pallas implementation of EnsembleModel.forward (student=None)."""
    B, C, H, W = x_nchw.shape
    D = C * H * W
    we_bf, be2, wdf_bf, bdf, logdet = prepared
    Hlat = we_bf.shape[1]

    # f32 input straight into the kernel (bf16 cast happens per-block inside).
    x2d = x_nchw.reshape(B, D).astype(jnp.float32)
    b8 = _round_up(B, 8)
    if b8 != B:  # tiny (<8 row) alignment pad; no-op for typical batch sizes
        x2d = jnp.pad(x2d, ((0, b8 - B), (0, 0)))

    tb = _choose_tb(b8, tb_max)
    g = -(-b8 // tb)

    scalars = jnp.stack([
        logdet,
        jnp.float32(w_ae),
        jnp.float32(w_flow),
        jnp.float32(math.log(2.0 * math.pi)),
    ])

    const2d = lambda i: (0, 0)
    out = pl.pallas_call(
        ensemble_kernel,
        out_shape=jax.ShapeDtypeStruct((g * tb, _OUT_LANES), jnp.float32),
        grid=(g,),
        in_specs=[
            pl.BlockSpec((tb, D), lambda i: (i, 0)),                 # x (pipelined)
            pl.BlockSpec((D, Hlat), const2d),                        # We (resident)
            pl.BlockSpec((1, Hlat), const2d),                        # be
            pl.BlockSpec((Hlat, D + Hlat), const2d),                 # [Wd | Wf]
            pl.BlockSpec((1, D + Hlat), const2d),                    # [bd | bf]
            pl.BlockSpec(memory_space=pltpu.MemorySpace.SMEM),       # scalars
        ],
        out_specs=pl.BlockSpec((tb, _OUT_LANES), lambda i: (i, 0)),
        compiler_params=pltpu.CompilerParams(
            dimension_semantics=("parallel",),
            vmem_limit_bytes=32 * 1024 * 1024),
    )(x2d, we_bf, be2, wdf_bf, bdf, scalars)

    return {
        "ae": out[:B, 0],
        "flow": out[:B, 1],
        "ensemble": out[:B, 2],
        "student": None,  # TODO(synk): student sub-module is None by default
    }


def _reference_forward(x_nchw, params, w_ae=0.5, w_flow=0.5):
    """Pure-JAX f32 reference for correctness checking."""
    B = x_nchw.shape[0]
    D = int(np.prod(x_nchw.shape[1:]))
    x = x_nchw.reshape(B, D).astype(jnp.float32)
    we, be, wd, bd, wf, bf = params
    z = jnp.tanh(x @ we + be)
    x_rec = z @ wd + bd
    ae_score = jnp.mean((x - x_rec) ** 2, axis=1)
    y = z @ wf + bf
    _, logdet = jnp.linalg.slogdet(wf)
    logprob = (-0.5 * jnp.sum(y * y, axis=1)
               - 0.5 * y.shape[1] * math.log(2.0 * math.pi) + logdet)
    flow_score = -logprob
    return ae_score, flow_score, w_ae * ae_score + w_flow * flow_score


if __name__ == "__main__":
    key = jax.random.PRNGKey(0)
    B, C, Himg, Wimg = 2, 4, 16, 16
    D = C * Himg * Wimg      # 1024
    Hlat = 32                # latent dim

    k_x, k_we, k_be, k_wd, k_bd, k_wf, k_bf = jax.random.split(key, 7)
    x = jax.random.normal(k_x, (B, C, Himg, Wimg), dtype=jnp.float32)

    params = (
        jax.random.normal(k_we, (D, Hlat), dtype=jnp.float32) * 0.05,    # We
        jax.random.normal(k_be, (Hlat,), dtype=jnp.float32) * 0.01,      # be
        jax.random.normal(k_wd, (Hlat, D), dtype=jnp.float32) * 0.05,    # Wd
        jax.random.normal(k_bd, (D,), dtype=jnp.float32) * 0.01,         # bd
        jnp.eye(Hlat, dtype=jnp.float32)
        + jax.random.normal(k_wf, (Hlat, Hlat), dtype=jnp.float32) * 0.05,  # Wf
        jax.random.normal(k_bf, (Hlat,), dtype=jnp.float32) * 0.01,      # bf
    )

    prepared = prepare_ensemble_params(params)   # one-time weight prep
    out = ensemble_forward(x, prepared)
    jax.block_until_ready(out["ensemble"])

    # Tolerance relaxed vs the pure-f32 reference because matmul operands are bf16.
    ae_ref, flow_ref, ens_ref = _reference_forward(x, params)
    np.testing.assert_allclose(np.asarray(out["ae"]), np.asarray(ae_ref),
                               rtol=2e-2, atol=2e-2)
    np.testing.assert_allclose(np.asarray(out["flow"]), np.asarray(flow_ref),
                               rtol=2e-2, atol=2e-2)
    np.testing.assert_allclose(np.asarray(out["ensemble"]), np.asarray(ens_ref),
                               rtol=2e-2, atol=2e-2)
    assert out["student"] is None

    print("KERNEL_OK")
</pallas_src>

<mosaic_0001>
module attributes {stable_mosaic.version = 11 : i64} {
  func.func @ensemble_kernel(%arg0: i32, %arg1: memref<8x1024xf32, #tpu.memory_space<vmem>>, %arg2: memref<1024x32xbf16, #tpu.memory_space<vmem>>, %arg3: memref<1x32xf32, #tpu.memory_space<vmem>>, %arg4: memref<32x1056xbf16, #tpu.memory_space<vmem>>, %arg5: memref<1x1056xf32, #tpu.memory_space<vmem>>, %arg6: memref<4xf32, #tpu.memory_space<smem>>, %arg7: memref<8x8xf32, #tpu.memory_space<vmem>>) attributes {dimension_semantics = [#tpu.dimension_semantics<parallel>], iteration_bounds = array<i64: 1>, scalar_prefetch = 0 : i64, scratch_operands = 0 : i64, tpu.core_type = #tpu.core_type<tc>, window_params = [{transform_indices = @transform_0, window_bounds = array<i64: 8, 1024>}, {pipeline_mode = #tpu.pipeline_mode<synchronous>, transform_indices = @transform_1, window_bounds = array<i64: 1024, 32>}, {pipeline_mode = #tpu.pipeline_mode<synchronous>, transform_indices = @transform_2, window_bounds = array<i64: 1, 32>}, {pipeline_mode = #tpu.pipeline_mode<synchronous>, transform_indices = @transform_3, window_bounds = array<i64: 32, 1056>}, {pipeline_mode = #tpu.pipeline_mode<synchronous>, transform_indices = @transform_4, window_bounds = array<i64: 1, 1056>}, {transform_indices = @transform_5, window_bounds = array<i64: 4>}, {transform_indices = @transform_6, window_bounds = array<i64: 8, 8>}]} {
    %c0 = arith.constant 0 : index
    %c0_0 = arith.constant 0 : index
    %0 = vector.load %arg1[%c0, %c0_0] : memref<8x1024xf32, #tpu.memory_space<vmem>>, vector<8x1024xf32>
    %1 = arith.truncf %0 : vector<8x1024xf32> to vector<8x1024xbf16>
    %c0_1 = arith.constant 0 : index
    %c0_2 = arith.constant 0 : index
    %2 = vector.load %arg2[%c0_1, %c0_2] : memref<1024x32xbf16, #tpu.memory_space<vmem>>, vector<1024x32xbf16>
    %cst = arith.constant dense<0.000000e+00> : vector<8x32xf32>
    %3 = tpu.matmul %1, %2, %cst {dimension_numbers = #tpu.dot_dimension_numbers<[1], [0], [0], [1], [0, 0, 1, 1], [], []>} : vector<8x1024xbf16>, vector<1024x32xbf16>, vector<8x32xf32> -> vector<8x32xf32>
    %c0_3 = arith.constant 0 : index
    %c0_4 = arith.constant 0 : index
    %4 = vector.load %arg3[%c0_3, %c0_4] : memref<1x32xf32, #tpu.memory_space<vmem>>, vector<1x32xf32>
    %5 = vector.broadcast %4 : vector<1x32xf32> to vector<8x32xf32>
    %6 = arith.addf %3, %5 : vector<8x32xf32>
    %7 = math.tanh %6 : vector<8x32xf32>
    %8 = arith.truncf %7 : vector<8x32xf32> to vector<8x32xbf16>
    %c0_5 = arith.constant 0 : index
    %c0_6 = arith.constant 0 : index
    %9 = vector.load %arg4[%c0_5, %c0_6] : memref<32x1056xbf16, #tpu.memory_space<vmem>>, vector<32x1056xbf16>
    %cst_7 = arith.constant dense<0.000000e+00> : vector<8x1056xf32>
    %10 = tpu.matmul %8, %9, %cst_7 {dimension_numbers = #tpu.dot_dimension_numbers<[1], [0], [0], [1], [0, 0, 1, 1], [], []>} : vector<8x32xbf16>, vector<32x1056xbf16>, vector<8x1056xf32> -> vector<8x1056xf32>
    %c0_8 = arith.constant 0 : index
    %c0_9 = arith.constant 0 : index
    %11 = vector.load %arg5[%c0_8, %c0_9] : memref<1x1056xf32, #tpu.memory_space<vmem>>, vector<1x1056xf32>
    %12 = vector.broadcast %11 : vector<1x1056xf32> to vector<8x1056xf32>
    %13 = arith.addf %10, %12 : vector<8x1056xf32>
    %14 = vector.extract_strided_slice %13 {offsets = [0, 0], sizes = [8, 1024], strides = [1, 1]} : vector<8x1056xf32> to vector<8x1024xf32>
    %15 = vector.extract_strided_slice %13 {offsets = [0, 1024], sizes = [8, 32], strides = [1, 1]} : vector<8x1056xf32> to vector<8x32xf32>
    %16 = arith.subf %0, %14 : vector<8x1024xf32>
    %17 = arith.mulf %16, %16 : vector<8x1024xf32>
    %cst_10 = arith.constant dense<0.000000e+00> : vector<8xf32>
    %18 = vector.multi_reduction <add>, %17, %cst_10 [1] : vector<8x1024xf32> to vector<8xf32>
    %19 = vector.shape_cast %18 : vector<8xf32> to vector<8x1xf32>
    %cst_11 = arith.constant 9.765625E-4 : f32
    %20 = vector.broadcast %cst_11 : f32 to vector<8x1xf32>
    %21 = arith.mulf %19, %20 : vector<8x1xf32>
    %c0_12 = arith.constant 0 : index
    %22 = memref.load %arg6[%c0_12] : memref<4xf32, #tpu.memory_space<smem>>
    %c1 = arith.constant 1 : index
    %23 = memref.load %arg6[%c1] : memref<4xf32, #tpu.memory_space<smem>>
    %c2 = arith.constant 2 : index
    %24 = memref.load %arg6[%c2] : memref<4xf32, #tpu.memory_space<smem>>
    %c3 = arith.constant 3 : index
    %25 = memref.load %arg6[%c3] : memref<4xf32, #tpu.memory_space<smem>>
    %26 = arith.mulf %15, %15 : vector<8x32xf32>
    %cst_13 = arith.constant dense<0.000000e+00> : vector<8xf32>
    %27 = vector.multi_reduction <add>, %26, %cst_13 [1] : vector<8x32xf32> to vector<8xf32>
    %28 = vector.shape_cast %27 : vector<8xf32> to vector<8x1xf32>
    %cst_14 = arith.constant 5.000000e-01 : f32
    %29 = vector.broadcast %cst_14 : f32 to vector<8x1xf32>
    %30 = arith.mulf %29, %28 : vector<8x1xf32>
    %cst_15 = arith.constant 1.600000e+01 : f32
    %31 = arith.mulf %cst_15, %25 : f32
    %32 = vector.broadcast %31 : f32 to vector<8x1xf32>
    %33 = arith.addf %30, %32 : vector<8x1xf32>
    %34 = vector.broadcast %22 : f32 to vector<8x1xf32>
    %35 = arith.subf %33, %34 : vector<8x1xf32>
    %36 = vector.broadcast %23 : f32 to vector<8x1xf32>
    %37 = arith.mulf %36, %21 : vector<8x1xf32>
    %38 = vector.broadcast %24 : f32 to vector<8x1xf32>
    %39 = arith.mulf %38, %35 : vector<8x1xf32>
    %40 = arith.addf %37, %39 : vector<8x1xf32>
    %41 = tpu.iota {dimensions = array<i32: 1>} : vector<8x8xi32>
    %c0_i32 = arith.constant 0 : i32
    %42 = vector.broadcast %c0_i32 : i32 to vector<8x8xi32>
    %43 = arith.cmpi eq, %41, %42 : vector<8x8xi32>
    %c1_i32 = arith.constant 1 : i32
    %44 = vector.broadcast %c1_i32 : i32 to vector<8x8xi32>
    %45 = arith.cmpi eq, %41, %44 : vector<8x8xi32>
    %c2_i32 = arith.constant 2 : i32
    %46 = vector.broadcast %c2_i32 : i32 to vector<8x8xi32>
    %47 = arith.cmpi eq, %41, %46 : vector<8x8xi32>
    %cst_16 = arith.constant 0.000000e+00 : f32
    %48 = vector.shape_cast %40 : vector<8x1xf32> to vector<8x1xf32>
    %49 = vector.broadcast %48 : vector<8x1xf32> to vector<8x8xf32>
    %50 = vector.broadcast %cst_16 : f32 to vector<8x8xf32>
    %51 = arith.select %47, %49, %50 : vector<8x8xi1>, vector<8x8xf32>
    %52 = vector.shape_cast %35 : vector<8x1xf32> to vector<8x1xf32>
    %53 = vector.broadcast %52 : vector<8x1xf32> to vector<8x8xf32>
    %54 = arith.select %45, %53, %51 : vector<8x8xi1>, vector<8x8xf32>
    %55 = vector.shape_cast %21 : vector<8x1xf32> to vector<8x1xf32>
    %56 = vector.broadcast %55 : vector<8x1xf32> to vector<8x8xf32>
    %57 = arith.select %43, %56, %54 : vector<8x8xi1>, vector<8x8xf32>
    %c0_17 = arith.constant 0 : index
    %c0_18 = arith.constant 0 : index
    %58 = vector.load %arg7[%c0_17, %c0_18] : memref<8x8xf32, #tpu.memory_space<vmem>>, vector<8x8xf32>
    tpu.vector_store %arg7[%c0_17, %c0_18], %57 {strides = array<i32>} : memref<8x8xf32, #tpu.memory_space<vmem>>, vector<8x8xf32>,
    return
  }
  func.func @transform_0(%arg0: i32) -> (i32, i32) {
    %c0_i32 = arith.constant 0 : i32
    %c0_i32_0 = arith.constant 0 : i32
    return %arg0, %c0_i32 : i32, i32
  }
  func.func @transform_1(%arg0: i32) -> (i32, i32) {
    %c0_i32 = arith.constant 0 : i32
    %c0_i32_0 = arith.constant 0 : i32
    %c0_i32_1 = arith.constant 0 : i32
    return %c0_i32, %c0_i32_0 : i32, i32
  }
  func.func @transform_2(%arg0: i32) -> (i32, i32) {
    %c0_i32 = arith.constant 0 : i32
    %c0_i32_0 = arith.constant 0 : i32
    %c0_i32_1 = arith.constant 0 : i32
    return %c0_i32, %c0_i32_0 : i32, i32
  }
  func.func @transform_3(%arg0: i32) -> (i32, i32) {
    %c0_i32 = arith.constant 0 : i32
    %c0_i32_0 = arith.constant 0 : i32
    %c0_i32_1 = arith.constant 0 : i32
    return %c0_i32, %c0_i32_0 : i32, i32
  }
  func.func @transform_4(%arg0: i32) -> (i32, i32) {
    %c0_i32 = arith.constant 0 : i32
    %c0_i32_0 = arith.constant 0 : i32
    %c0_i32_1 = arith.constant 0 : i32
    return %c0_i32, %c0_i32_0 : i32, i32
  }
  func.func @transform_5(%arg0: i32) -> i32 {
    %c0_i32 = arith.constant 0 : i32
    %c0_i32_0 = arith.constant 0 : i32
    return %c0_i32 : i32
  }
  func.func @transform_6(%arg0: i32) -> (i32, i32) {
    %c0_i32 = arith.constant 0 : i32
    %c0_i32_0 = arith.constant 0 : i32
    return %arg0, %c0_i32 : i32, i32
  }
}

</mosaic_0001>

<llo_original>
// kernel: tpu_custom_call.1
$region0: #{tpu_custom_call.1}
  #allocation0 [shape = 'u32[]', space=smem, size = 0x4, offset = 0x4, fixed_abs, tag = 'smem constant byte address 0x4 - core index']
  #allocation1 [shape = 'u32[144,128]{1,0:T(1,128)}', space=vmem, size = 0x12000, scoped, tag = 'internal scratch']
  %s0 = inlined_call_operand.vmem [shape: f32[8,1024], index: 0, kind: input, shape index: {}]
  %s1 = inlined_call_operand.vmem [shape: bf16[1024,32], index: 1, kind: input, shape index: {}]
  %s2 = inlined_call_operand.vmem [shape: f32[1,32], index: 2, kind: input, shape index: {}]
  %s3 = inlined_call_operand.vmem [shape: bf16[32,1056], index: 3, kind: input, shape index: {}]
  %s4 = inlined_call_operand.vmem [shape: f32[1,1056], index: 4, kind: input, shape index: {}]
  %s5 = inlined_call_operand.vmem [shape: f32[4], index: 5, kind: input, shape index: {}]
  %s6 = inlined_call_operand.hbm [shape: f32[8,8], index: 6, kind: output, shape index: {}]
  %s7 = sld [smem:[#allocation0]]
  $region38: #{tpu_custom_call.1} parent=0
    _
  %s9 = ssub.s32 1, %s7
  %s10 = scalar_select 0, %s9, %s7
  $region1: #{tpu_custom_call.1} parent=0
    #allocation2 [shape = 'u8[512]{0}', space=smem, size = 0x200, scoped, tag = 'input window, operand 5, single buffered']
    #allocation3 [shape = 's32[1]{0}', space=sflag, size = 0x4, scoped, tag = 'scoped memory for tpu_custom_call.1']
    #allocation4 [shape = 's32[1]{0}', space=sflag, size = 0x4, scoped, tag = 'scoped memory for tpu_custom_call.1']
    #allocation5 [shape = 'u8[4096]{0}', space=vmem, size = 0x1000, scoped, tag = 'output window, operand 0, single buffered']
    %11 = vsyncpa [#allocation4], 0
    %12 = vsyncpa [#allocation3], 0
    // Predicated region
    $region2: #{tpu_custom_call.1} parent=1 // pred_check
      _
    $region3: #{tpu_custom_call.1} parent=1 // pred_check_branch
      %14 = sbr.rel (0) target = $region5
    $region4: #{tpu_custom_call.1} parent=1 // pred_region
      _
    $region5: #{tpu_custom_call.1} parent=1 // pred_fallthru
      _
    // Predicated region
    $region6: #{tpu_custom_call.1} parent=1 // pred_check
      _
    $region7: #{tpu_custom_call.1} parent=1 // pred_check_branch
      %16 = sbr.rel (0) target = $region9
    $region8: #{tpu_custom_call.1} parent=1 // pred_region
      _
    $region9: #{tpu_custom_call.1} parent=1 // pred_fallthru
      _
    // Predicated region
    $region10: #{tpu_custom_call.1} parent=1 // pred_check
      _
    $region11: #{tpu_custom_call.1} parent=1 // pred_check_branch
      %18 = sbr.rel (0) target = $region13
    $region12: #{tpu_custom_call.1} parent=1 // pred_region
      _
    $region13: #{tpu_custom_call.1} parent=1 // pred_fallthru
      _
    // Predicated region
    $region14: #{tpu_custom_call.1} parent=1 // pred_check
      _
    $region15: #{tpu_custom_call.1} parent=1 // pred_check_branch
      %20 = sbr.rel (0) target = $region17
    $region16: #{tpu_custom_call.1} parent=1 // pred_region
      _
    $region17: #{tpu_custom_call.1} parent=1 // pred_fallthru
      _
    // Predicated region
    $region18: #{tpu_custom_call.1} parent=1 // pred_check
      _
    $region19: #{tpu_custom_call.1} parent=1 // pred_check_branch
      %22 = sbr.rel (0) target = $region21
    $region20: #{tpu_custom_call.1} parent=1 // pred_region
      _
    $region21: #{tpu_custom_call.1} parent=1 // pred_fallthru
      _
    // Predicated region
    $region22: #{tpu_custom_call.1} parent=1 // pred_check
      _
    $region23: #{tpu_custom_call.1} parent=1 // pred_check_branch
      %24 = sbr.rel (0) target = $region25
    $region24: #{tpu_custom_call.1} parent=1 // pred_region
      %s26 = ssub.s32 16, 16
      %27 = vsyncadd [#allocation4], %s26
      %s29 = sshll.u32 %s5, 4
      %s30 = int_to_ptr.vmem [resolvable:$true] %s29
      %32 = dma.vmem_to_smem %s30, 16, [#allocation2], [#allocation4]
    $region25: #{tpu_custom_call.1} parent=1 // pred_fallthru
      _
    // Predicated region
    $region26: #{tpu_custom_call.1} parent=1 // pred_check
      _
    $region27: #{tpu_custom_call.1} parent=1 // pred_check_branch
      %34 = sbr.rel (0) target = $region29
    $region28: #{tpu_custom_call.1} parent=1 // pred_region
      %35 = dma.done [#allocation4], 16
    $region29: #{tpu_custom_call.1} parent=1 // pred_fallthru
      _
    %36 = sfence
    %v38 = vld [vmem:[%s0] sm:$0xff]
    %v39 = vld [vmem:[%s0 + $0x8] sm:$0xff]
    %v40 = vld [vmem:[%s0 + $0x10] sm:$0xff]
    %v41 = vld [vmem:[%s0 + $0x18] sm:$0xff]
    %v42 = vld [vmem:[%s0 + $0x20] sm:$0xff]
    %v43 = vld [vmem:[%s0 + $0x28] sm:$0xff]
    %v44 = vld [vmem:[%s0 + $0x30] sm:$0xff]
    %v45 = vld [vmem:[%s0 + $0x38] sm:$0xff]
    %v46 = vpack.c.bf16 %v38, %v38
    %v47 = vpack.c.bf16 %v39, %v39
    %v48 = vpack.c.bf16 %v40, %v40
    %v49 = vpack.c.bf16 %v41, %v41
    %v50 = vpack.c.bf16 %v42, %v42
    %v51 = vpack.c.bf16 %v43, %v43
    %v52 = vpack.c.bf16 %v44, %v44
    %v53 = vpack.c.bf16 %v45, %v45
    %v54 = vld [vmem:[%s1] sm:$0xf]
    %v55 = vld [vmem:[%s1 + $0x4] sm:$0xf]
    %v56 = vld [vmem:[%s1 + $0x8] sm:$0xf]
    %v57 = vld [vmem:[%s1 + $0xc] sm:$0xf]
    %v58 = vld [vmem:[%s1 + $0x10] sm:$0xf]
    %v59 = vld [vmem:[%s1 + $0x14] sm:$0xf]
    %v60 = vld [vmem:[%s1 + $0x18] sm:$0xf]
    %v61 = vld [vmem:[%s1 + $0x1c] sm:$0xf]
    %v62 = vld [vmem:[%s1 + $0x20] sm:$0xf]
    %v63 = vld [vmem:[%s1 + $0x24] sm:$0xf]
    %v64 = vld [vmem:[%s1 + $0x28] sm:$0xf]
    %v65 = vld [vmem:[%s1 + $0x2c] sm:$0xf]
    %v66 = vld [vmem:[%s1 + $0x30] sm:$0xf]
    %v67 = vld [vmem:[%s1 + $0x34] sm:$0xf]
    %v68 = vld [vmem:[%s1 + $0x38] sm:$0xf]
    %v69 = vld [vmem:[%s1 + $0x3c] sm:$0xf]
    %v70 = vld [vmem:[%s1 + $0x40] sm:$0xf]
    %v71 = vld [vmem:[%s1 + $0x44] sm:$0xf]
    %v72 = vld [vmem:[%s1 + $0x48] sm:$0xf]
    %v73 = vld [vmem:[%s1 + $0x4c] sm:$0xf]
    %v74 = vld [vmem:[%s1 + $0x50] sm:$0xf]
    %v75 = vld [vmem:[%s1 + $0x54] sm:$0xf]
    %v76 = vld [vmem:[%s1 + $0x58] sm:$0xf]
    %v77 = vld [vmem:[%s1 + $0x5c] sm:$0xf]
    %v78 = vld [vmem:[%s1 + $0x60] sm:$0xf]
    %v79 = vld [vmem:[%s1 + $0x64] sm:$0xf]
    %v80 = vld [vmem:[%s1 + $0x68] sm:$0xf]
    %v81 = vld [vmem:[%s1 + $0x6c] sm:$0xf]
    %v82 = vld [vmem:[%s1 + $0x70] sm:$0xf]
    %v83 = vld [vmem:[%s1 + $0x74] sm:$0xf]
    %v84 = vld [vmem:[%s1 + $0x78] sm:$0xf]
    %v85 = vld [vmem:[%s1 + $0x7c] sm:$0xf]
    %v86 = vld [vmem:[%s1 + $0x80] sm:$0xf]
    %v87 = vld [vmem:[%s1 + $0x84] sm:$0xf]
    %v88 = vld [vmem:[%s1 + $0x88] sm:$0xf]
    %v89 = vld [vmem:[%s1 + $0x8c] sm:$0xf]
    %v90 = vld [vmem:[%s1 + $0x90] sm:$0xf]
    %v91 = vld [vmem:[%s1 + $0x94] sm:$0xf]
    %v92 = vld [vmem:[%s1 + $0x98] sm:$0xf]
    %v93 = vld [vmem:[%s1 + $0x9c] sm:$0xf]
    %v94 = vld [vmem:[%s1 + $0xa0] sm:$0xf]
    %v95 = vld [vmem:[%s1 + $0xa4] sm:$0xf]
    %v96 = vld [vmem:[%s1 + $0xa8] sm:$0xf]
    %v97 = vld [vmem:[%s1 + $0xac] sm:$0xf]
    %v98 = vld [vmem:[%s1 + $0xb0] sm:$0xf]
    %v99 = vld [vmem:[%s1 + $0xb4] sm:$0xf]
    %v100 = vld [vmem:[%s1 + $0xb8] sm:$0xf]
    %v101 = vld [vmem:[%s1 + $0xbc] sm:$0xf]
    %v102 = vld [vmem:[%s1 + $0xc0] sm:$0xf]
    %v103 = vld [vmem:[%s1 + $0xc4] sm:$0xf]
    %v104 = vld [vmem:[%s1 + $0xc8] sm:$0xf]
    %v105 = vld [vmem:[%s1 + $0xcc] sm:$0xf]
    %v106 = vld [vmem:[%s1 + $0xd0] sm:$0xf]
    %v107 = vld [vmem:[%s1 + $0xd4] sm:$0xf]
    %v108 = vld [vmem:[%s1 + $0xd8] sm:$0xf]
    %v109 = vld [vmem:[%s1 + $0xdc] sm:$0xf]
    %v110 = vld [vmem:[%s1 + $0xe0] sm:$0xf]
    %v111 = vld [vmem:[%s1 + $0xe4] sm:$0xf]
    %v112 = vld [vmem:[%s1 + $0xe8] sm:$0xf]
    %v113 = vld [vmem:[%s1 + $0xec] sm:$0xf]
    %v114 = vld [vmem:[%s1 + $0xf0] sm:$0xf]
    %v115 = vld [vmem:[%s1 + $0xf4] sm:$0xf]
    %v116 = vld [vmem:[%s1 + $0xf8] sm:$0xf]
    %v117 = vld [vmem:[%s1 + $0xfc] sm:$0xf]
    %v118 = vld [vmem:[%s1 + $0x100] sm:$0xf]
    %v119 = vld [vmem:[%s1 + $0x104] sm:$0xf]
    %v120 = vld [vmem:[%s1 + $0x108] sm:$0xf]
    %v121 = vld [vmem:[%s1 + $0x10c] sm:$0xf]
    %v122 = vld [vmem:[%s1 + $0x110] sm:$0xf]
    %v123 = vld [vmem:[%s1 + $0x114] sm:$0xf]
    %v124 = vld [vmem:[%s1 + $0x118] sm:$0xf]
    %v125 = vld [vmem:[%s1 + $0x11c] sm:$0xf]
    %v126 = vld [vmem:[%s1 + $0x120] sm:$0xf]
    %v127 = vld [vmem:[%s1 + $0x124] sm:$0xf]
    %v128 = vld [vmem:[%s1 + $0x128] sm:$0xf]
    %v129 = vld [vmem:[%s1 + $0x12c] sm:$0xf]
    %v130 = vld [vmem:[%s1 + $0x130] sm:$0xf]
    %v131 = vld [vmem:[%s1 + $0x134] sm:$0xf]
    %v132 = vld [vmem:[%s1 + $0x138] sm:$0xf]
    %v133 = vld [vmem:[%s1 + $0x13c] sm:$0xf]
    %v134 = vld [vmem:[%s1 + $0x140] sm:$0xf]
    %v135 = vld [vmem:[%s1 + $0x144] sm:$0xf]
    %v136 = vld [vmem:[%s1 + $0x148] sm:$0xf]
    %v137 = vld [vmem:[%s1 + $0x14c] sm:$0xf]
    %v138 = vld [vmem:[%s1 + $0x150] sm:$0xf]
    %v139 = vld [vmem:[%s1 + $0x154] sm:$0xf]
    %v140 = vld [vmem:[%s1 + $0x158] sm:$0xf]
    %v141 = vld [vmem:[%s1 + $0x15c] sm:$0xf]
    %v142 = vld [vmem:[%s1 + $0x160] sm:$0xf]
    %v143 = vld [vmem:[%s1 + $0x164] sm:$0xf]
    %v144 = vld [vmem:[%s1 + $0x168] sm:$0xf]
    %v145 = vld [vmem:[%s1 + $0x16c] sm:$0xf]
    %v146 = vld [vmem:[%s1 + $0x170] sm:$0xf]
    %v147 = vld [vmem:[%s1 + $0x174] sm:$0xf]
    %v148 = vld [vmem:[%s1 + $0x178] sm:$0xf]
    %v149 = vld [vmem:[%s1 + $0x17c] sm:$0xf]
    %v150 = vld [vmem:[%s1 + $0x180] sm:$0xf]
    %v151 = vld [vmem:[%s1 + $0x184] sm:$0xf]
    %v152 = vld [vmem:[%s1 + $0x188] sm:$0xf]
    %v153 = vld [vmem:[%s1 + $0x18c] sm:$0xf]
    %v154 = vld [vmem:[%s1 + $0x190] sm:$0xf]
    %v155 = vld [vmem:[%s1 + $0x194] sm:$0xf]
    %v156 = vld [vmem:[%s1 + $0x198] sm:$0xf]
    %v157 = vld [vmem:[%s1 + $0x19c] sm:$0xf]
    %v158 = vld [vmem:[%s1 + $0x1a0] sm:$0xf]
    %v159 = vld [vmem:[%s1 + $0x1a4] sm:$0xf]
    %v160 = vld [vmem:[%s1 + $0x1a8] sm:$0xf]
    %v161 = vld [vmem:[%s1 + $0x1ac] sm:$0xf]
    %v162 = vld [vmem:[%s1 + $0x1b0] sm:$0xf]
    %v163 = vld [vmem:[%s1 + $0x1b4] sm:$0xf]
    %v164 = vld [vmem:[%s1 + $0x1b8] sm:$0xf]
    %v165 = vld [vmem:[%s1 + $0x1bc] sm:$0xf]
    %v166 = vld [vmem:[%s1 + $0x1c0] sm:$0xf]
    %v167 = vld [vmem:[%s1 + $0x1c4] sm:$0xf]
    %v168 = vld [vmem:[%s1 + $0x1c8] sm:$0xf]
    %v169 = vld [vmem:[%s1 + $0x1cc] sm:$0xf]
    %v170 = vld [vmem:[%s1 + $0x1d0] sm:$0xf]
    %v171 = vld [vmem:[%s1 + $0x1d4] sm:$0xf]
    %v172 = vld [vmem:[%s1 + $0x1d8] sm:$0xf]
    %v173 = vld [vmem:[%s1 + $0x1dc] sm:$0xf]
    %v174 = vld [vmem:[%s1 + $0x1e0] sm:$0xf]
    %v175 = vld [vmem:[%s1 + $0x1e4] sm:$0xf]
    %v176 = vld [vmem:[%s1 + $0x1e8] sm:$0xf]
    %v177 = vld [vmem:[%s1 + $0x1ec] sm:$0xf]
    %v178 = vld [vmem:[%s1 + $0x1f0] sm:$0xf]
    %v179 = vld [vmem:[%s1 + $0x1f4] sm:$0xf]
    %v180 = vld [vmem:[%s1 + $0x1f8] sm:$0xf]
    %v181 = vld [vmem:[%s1 + $0x1fc] sm:$0xf]
    %v182 = vld [vmem:[%s2] sm:$0x1]
    %v184 = vlaneseq
    %v185 = vshrl.u32 %v184, 7
    %v186 = vsub.s32 0, %v185
    %v187 = vrot.slane %v182, %v186
    %v317 = vunpack.c.l.b16 %v54
    %v318 = vunpack.c.l.b16 %v55
    %v319 = vunpack.c.l.b16 %v56
    %v320 = vunpack.c.l.b16 %v57
    %v321 = vunpack.c.l.b16 %v58
    %v322 = vunpack.c.l.b16 %v59
    %v323 = vunpack.c.l.b16 %v60
    %v324 = vunpack.c.l.b16 %v61
    %v325 = vunpack.c.l.b16 %v62
    %v326 = vunpack.c.l.b16 %v63
    %v327 = vunpack.c.l.b16 %v64
    %v328 = vunpack.c.l.b16 %v65
    %v329 = vunpack.c.l.b16 %v66
    %v330 = vunpack.c.l.b16 %v67
    %v331 = vunpack.c.l.b16 %v68
    %v332 = vunpack.c.l.b16 %v69
    %v333 = vunpack.c.l.b16 %v70
    %v334 = vunpack.c.l.b16 %v71
    %v335 = vunpack.c.l.b16 %v72
    %v336 = vunpack.c.l.b16 %v73
    %v337 = vunpack.c.l.b16 %v74
    %v338 = vunpack.c.l.b16 %v75
    %v339 = vunpack.c.l.b16 %v76
    %v340 = vunpack.c.l.b16 %v77
    %v341 = vunpack.c.l.b16 %v78
    %v342 = vunpack.c.l.b16 %v79
    %v343 = vunpack.c.l.b16 %v80
    %v344 = vunpack.c.l.b16 %v81
    %v345 = vunpack.c.l.b16 %v82
    %v346 = vunpack.c.l.b16 %v83
    %v347 = vunpack.c.l.b16 %v84
    %v348 = vunpack.c.l.b16 %v85
    %v349 = vunpack.c.l.b16 %v86
    %v350 = vunpack.c.l.b16 %v87
    %v351 = vunpack.c.l.b16 %v88
    %v352 = vunpack.c.l.b16 %v89
    %v353 = vunpack.c.l.b16 %v90
    %v354 = vunpack.c.l.b16 %v91
    %v355 = vunpack.c.l.b16 %v92
    %v356 = vunpack.c.l.b16 %v93
    %v357 = vunpack.c.l.b16 %v94
    %v358 = vunpack.c.l.b16 %v95
    %v359 = vunpack.c.l.b16 %v96
    %v360 = vunpack.c.l.b16 %v97
    %v361 = vunpack.c.l.b16 %v98
    %v362 = vunpack.c.l.b16 %v99
    %v363 = vunpack.c.l.b16 %v100
    %v364 = vunpack.c.l.b16 %v101
    %v365 = vunpack.c.l.b16 %v102
    %v366 = vunpack.c.l.b16 %v103
    %v367 = vunpack.c.l.b16 %v104
    %v368 = vunpack.c.l.b16 %v105
    %v369 = vunpack.c.l.b16 %v106
    %v370 = vunpack.c.l.b16 %v107
    %v371 = vunpack.c.l.b16 %v108
    %v372 = vunpack.c.l.b16 %v109
    %v373 = vunpack.c.l.b16 %v110
    %v374 = vunpack.c.l.b16 %v111
    %v375 = vunpack.c.l.b16 %v112
    %v376 = vunpack.c.l.b16 %v113
    %v377 = vunpack.c.l.b16 %v114
    %v378 = vunpack.c.l.b16 %v115
    %v379 = vunpack.c.l.b16 %v116
    %v380 = vunpack.c.l.b16 %v117
    %v381 = vunpack.c.l.b16 %v118
    %v382 = vunpack.c.l.b16 %v119
    %v383 = vunpack.c.l.b16 %v120
    %v384 = vunpack.c.l.b16 %v121
    %v385 = vunpack.c.l.b16 %v122
    %v386 = vunpack.c.l.b16 %v123
    %v387 = vunpack.c.l.b16 %v124
    %v388 = vunpack.c.l.b16 %v125
    %v389 = vunpack.c.l.b16 %v126
    %v390 = vunpack.c.l.b16 %v127
    %v391 = vunpack.c.l.b16 %v128
    %v392 = vunpack.c.l.b16 %v129
    %v393 = vunpack.c.l.b16 %v130
    %v394 = vunpack.c.l.b16 %v131
    %v395 = vunpack.c.l.b16 %v132
    %v396 = vunpack.c.l.b16 %v133
    %v397 = vunpack.c.l.b16 %v134
    %v398 = vunpack.c.l.b16 %v135
    %v399 = vunpack.c.l.b16 %v136
    %v400 = vunpack.c.l.b16 %v137
    %v401 = vunpack.c.l.b16 %v138
    %v402 = vunpack.c.l.b16 %v139
    %v403 = vunpack.c.l.b16 %v140
    %v404 = vunpack.c.l.b16 %v141
    %v405 = vunpack.c.l.b16 %v142
    %v406 = vunpack.c.l.b16 %v143
    %v407 = vunpack.c.l.b16 %v144
    %v408 = vunpack.c.l.b16 %v145
    %v409 = vunpack.c.l.b16 %v146
    %v410 = vunpack.c.l.b16 %v147
    %v411 = vunpack.c.l.b16 %v148
    %v412 = vunpack.c.l.b16 %v149
    %v413 = vunpack.c.l.b16 %v150
    %v414 = vunpack.c.l.b16 %v151
    %v415 = vunpack.c.l.b16 %v152
    %v416 = vunpack.c.l.b16 %v153
    %v417 = vunpack.c.l.b16 %v154
    %v418 = vunpack.c.l.b16 %v155
    %v419 = vunpack.c.l.b16 %v156
    %v420 = vunpack.c.l.b16 %v157
    %v421 = vunpack.c.l.b16 %v158
    %v422 = vunpack.c.l.b16 %v159
    %v423 = vunpack.c.l.b16 %v160
    %v424 = vunpack.c.l.b16 %v161
    %v425 = vunpack.c.l.b16 %v162
    %v426 = vunpack.c.l.b16 %v163
    %v427 = vunpack.c.l.b16 %v164
    %v428 = vunpack.c.l.b16 %v165
    %v429 = vunpack.c.l.b16 %v166
    %v430 = vunpack.c.l.b16 %v167
    %v431 = vunpack.c.l.b16 %v168
    %v432 = vunpack.c.l.b16 %v169
    %v433 = vunpack.c.l.b16 %v170
    %v434 = vunpack.c.l.b16 %v171
    %v435 = vunpack.c.l.b16 %v172
    %v436 = vunpack.c.l.b16 %v173
    %v437 = vunpack.c.l.b16 %v174
    %v438 = vunpack.c.l.b16 %v175
    %v439 = vunpack.c.l.b16 %v176
    %v440 = vunpack.c.l.b16 %v177
    %v441 = vunpack.c.l.b16 %v178
    %v442 = vunpack.c.l.b16 %v179
    %v443 = vunpack.c.l.b16 %v180
    %v444 = vunpack.c.l.b16 %v181
    %v445 = vpack.c.b16 %v318, %v317
    %v446 = vpack.c.b16 %v320, %v319
    %v447 = vpack.c.b16 %v322, %v321
    %v448 = vpack.c.b16 %v324, %v323
    %v449 = vpack.c.b16 %v326, %v325
    %v450 = vpack.c.b16 %v328, %v327
    %v451 = vpack.c.b16 %v330, %v329
    %v452 = vpack.c.b16 %v332, %v331
    %v453 = vpack.c.b16 %v334, %v333
    %v454 = vpack.c.b16 %v336, %v335
    %v455 = vpack.c.b16 %v338, %v337
    %v456 = vpack.c.b16 %v340, %v339
    %v457 = vpack.c.b16 %v342, %v341
    %v458 = vpack.c.b16 %v344, %v343
    %v459 = vpack.c.b16 %v346, %v345
    %v460 = vpack.c.b16 %v348, %v347
    %v461 = vpack.c.b16 %v350, %v349
    %v462 = vpack.c.b16 %v352, %v351
    %v463 = vpack.c.b16 %v354, %v353
    %v464 = vpack.c.b16 %v356, %v355
    %v465 = vpack.c.b16 %v358, %v357
    %v466 = vpack.c.b16 %v360, %v359
    %v467 = vpack.c.b16 %v362, %v361
    %v468 = vpack.c.b16 %v364, %v363
    %v469 = vpack.c.b16 %v366, %v365
    %v470 = vpack.c.b16 %v368, %v367
    %v471 = vpack.c.b16 %v370, %v369
    %v472 = vpack.c.b16 %v372, %v371
    %v473 = vpack.c.b16 %v374, %v373
    %v474 = vpack.c.b16 %v376, %v375
    %v475 = vpack.c.b16 %v378, %v377
    %v476 = vpack.c.b16 %v380, %v379
    %v477 = vpack.c.b16 %v382, %v381
    %v478 = vpack.c.b16 %v384, %v383
    %v479 = vpack.c.b16 %v386, %v385
    %v480 = vpack.c.b16 %v388, %v387
    %v481 = vpack.c.b16 %v390, %v389
    %v482 = vpack.c.b16 %v392, %v391
    %v483 = vpack.c.b16 %v394, %v393
    %v484 = vpack.c.b16 %v396, %v395
    %v485 = vpack.c.b16 %v398, %v397
    %v486 = vpack.c.b16 %v400, %v399
    %v487 = vpack.c.b16 %v402, %v401
    %v488 = vpack.c.b16 %v404, %v403
    %v489 = vpack.c.b16 %v406, %v405
    %v490 = vpack.c.b16 %v408, %v407
    %v491 = vpack.c.b16 %v410, %v409
    %v492 = vpack.c.b16 %v412, %v411
    %v493 = vpack.c.b16 %v414, %v413
    %v494 = vpack.c.b16 %v416, %v415
    %v495 = vpack.c.b16 %v418, %v417
    %v496 = vpack.c.b16 %v420, %v419
    %v497 = vpack.c.b16 %v422, %v421
    %v498 = vpack.c.b16 %v424, %v423
    %v499 = vpack.c.b16 %v426, %v425
    %v500 = vpack.c.b16 %v428, %v427
    %v501 = vpack.c.b16 %v430, %v429
    %v502 = vpack.c.b16 %v432, %v431
    %v503 = vpack.c.b16 %v434, %v433
    %v504 = vpack.c.b16 %v436, %v435
    %v505 = vpack.c.b16 %v438, %v437
    %v506 = vpack.c.b16 %v440, %v439
    %v507 = vpack.c.b16 %v442, %v441
    %v508 = vpack.c.b16 %v444, %v443
    %573 = vmatprep.subr.bf16.mxu0 0
    %574 = vmatpush1.bf16.msra.mxu0 %v445
    %575 = vmatprep.subr.bf16.mxu0 0
    %576 = vmatpush1.bf16.msra.mxu0 %v446
    %577 = vmatprep.subr.bf16.mxu0 0
    %578 = vmatpush1.bf16.msra.mxu0 %v447
    %579 = vmatprep.subr.bf16.mxu0 0
    %580 = vmatpush1.bf16.msra.mxu0 %v448
    %581 = vmatprep.subr.bf16.mxu0 0
    %582 = vmatpush1.bf16.msra.mxu0 %v449
    %583 = vmatprep.subr.bf16.mxu0 0
    %584 = vmatpush1.bf16.msra.mxu0 %v450
    %585 = vmatprep.subr.bf16.mxu0 0
    %586 = vmatpush1.bf16.msra.mxu0 %v451
    %587 = vmatprep.subr.bf16.mxu0 0
    %588 = vmatpush1.bf16.msra.mxu0 %v452
    %589 = vmatprep.subr.bf16.mxu0 0
    %590 = vmatpush1.bf16.msra.mxu0 %v453
    %591 = vmatprep.subr.bf16.mxu0 0
    %592 = vmatpush1.bf16.msra.mxu0 %v454
    %593 = vmatprep.subr.bf16.mxu0 0
    %594 = vmatpush1.bf16.msra.mxu0 %v455
    %595 = vmatprep.subr.bf16.mxu0 0
    %596 = vmatpush1.bf16.msra.mxu0 %v456
    %597 = vmatprep.subr.bf16.mxu0 0
    %598 = vmatpush1.bf16.msra.mxu0 %v457
    %599 = vmatprep.subr.bf16.mxu0 0
    %600 = vmatpush1.bf16.msra.mxu0 %v458
    %601 = vmatprep.subr.bf16.mxu0 0
    %602 = vmatpush1.bf16.msra.mxu0 %v459
    %603 = vmatprep.subr.bf16.mxu0 0
    %604 = vmatpush1.bf16.msra.mxu0 %v460
    %605 = vmatprep.mubr.bf16.mxu0 %v47
    %606 = vmatmul.mubr.bf16.gmra.mrb[0].mxu0 %v46
    %v607 = vpop.f32.mrb[0].mxu0
    %v608 = vadd.f32 %v187, %v607
    %v609 = vpop.f32.mrb[0].mxu0
    %v610 = vpop.f32.mrb[0].mxu0
    %v611 = vpop.f32.mrb[0].mxu0
    %612 = vdwg.mxu0
    %613 = vmatprep.subr.bf16.mxu0 0
    %614 = vmatpush1.bf16.msra.mxu0 %v461
    %615 = vmatprep.subr.bf16.mxu0 0
    %616 = vmatpush1.bf16.msra.mxu0 %v462
    %617 = vmatprep.subr.bf16.mxu0 0
    %618 = vmatpush1.bf16.msra.mxu0 %v463
    %619 = vmatprep.subr.bf16.mxu0 0
    %620 = vmatpush1.bf16.msra.mxu0 %v464
    %621 = vmatprep.subr.bf16.mxu0 0
    %622 = vmatpush1.bf16.msra.mxu0 %v465
    %623 = vmatprep.subr.bf16.mxu0 0
    %624 = vmatpush1.bf16.msra.mxu0 %v466
    %625 = vmatprep.subr.bf16.mxu0 0
    %626 = vmatpush1.bf16.msra.mxu0 %v467
    %627 = vmatprep.subr.bf16.mxu0 0
    %628 = vmatpush1.bf16.msra.mxu0 %v468
    %629 = vmatprep.subr.bf16.mxu0 0
    %630 = vmatpush1.bf16.msra.mxu0 %v469
    %631 = vmatprep.subr.bf16.mxu0 0
    %632 = vmatpush1.bf16.msra.mxu0 %v470
    %633 = vmatprep.subr.bf16.mxu0 0
    %634 = vmatpush1.bf16.msra.mxu0 %v471
    %635 = vmatprep.subr.bf16.mxu0 0
    %636 = vmatpush1.bf16.msra.mxu0 %v472
    %637 = vmatprep.subr.bf16.mxu0 0
    %638 = vmatpush1.bf16.msra.mxu0 %v473
    %639 = vmatprep.subr.bf16.mxu0 0
    %640 = vmatpush1.bf16.msra.mxu0 %v474
    %641 = vmatprep.subr.bf16.mxu0 0
    %642 = vmatpush1.bf16.msra.mxu0 %v475
    %643 = vmatprep.subr.bf16.mxu0 0
    %644 = vmatpush1.bf16.msra.mxu0 %v476
    %645 = vmatprep.mubr.bf16.mxu0 %v49
    %646 = vmatmul.mubr.bf16.gmra.mrb[0].mxu0 %v48
    %v647 = vpop.f32.mrb[0].mxu0
    %v648 = vadd.f32 %v608, %v647
    %v649 = vpop.f32.mrb[0].mxu0
    %v650 = vpop.f32.mrb[0].mxu0
    %v651 = vpop.f32.mrb[0].mxu0
    %652 = vdwg.mxu0
    %653 = vmatprep.subr.bf16.mxu0 0
    %654 = vmatpush1.bf16.msra.mxu0 %v477
    %655 = vmatprep.subr.bf16.mxu0 0
    %656 = vmatpush1.bf16.msra.mxu0 %v478
    %657 = vmatprep.subr.bf16.mxu0 0
    %658 = vmatpush1.bf16.msra.mxu0 %v479
    %659 = vmatprep.subr.bf16.mxu0 0
    %660 = vmatpush1.bf16.msra.mxu0 %v480
    %661 = vmatprep.subr.bf16.mxu0 0
    %662 = vmatpush1.bf16.msra.mxu0 %v481
    %663 = vmatprep.subr.bf16.mxu0 0
    %664 = vmatpush1.bf16.msra.mxu0 %v482
    %665 = vmatprep.subr.bf16.mxu0 0
    %666 = vmatpush1.bf16.msra.mxu0 %v483
    %667 = vmatprep.subr.bf16.mxu0 0
    %668 = vmatpush1.bf16.msra.mxu0 %v484
    %669 = vmatprep.subr.bf16.mxu0 0
    %670 = vmatpush1.bf16.msra.mxu0 %v485
    %671 = vmatprep.subr.bf16.mxu0 0
    %672 = vmatpush1.bf16.msra.mxu0 %v486
    %673 = vmatprep.subr.bf16.mxu0 0
    %674 = vmatpush1.bf16.msra.mxu0 %v487
    %675 = vmatprep.subr.bf16.mxu0 0
    %676 = vmatpush1.bf16.msra.mxu0 %v488
    %677 = vmatprep.subr.bf16.mxu0 0
    %678 = vmatpush1.bf16.msra.mxu0 %v489
    %679 = vmatprep.subr.bf16.mxu0 0
    %680 = vmatpush1.bf16.msra.mxu0 %v490
    %681 = vmatprep.subr.bf16.mxu0 0
    %682 = vmatpush1.bf16.msra.mxu0 %v491
    %683 = vmatprep.subr.bf16.mxu0 0
    %684 = vmatpush1.bf16.msra.mxu0 %v492
    %685 = vmatprep.mubr.bf16.mxu0 %v51
    %686 = vmatmul.mubr.bf16.gmra.mrb[0].mxu0 %v50
    %v687 = vpop.f32.mrb[0].mxu0
    %v688 = vadd.f32 %v648, %v687
    %v689 = vpop.f32.mrb[0].mxu0
    %v690 = vpop.f32.mrb[0].mxu0
    %v691 = vpop.f32.mrb[0].mxu0
    %692 = vdwg.mxu0
    %693 = vmatprep.subr.bf16.mxu0 0
    %694 = vmatpush1.bf16.msra.mxu0 %v493
    %695 = vmatprep.subr.bf16.mxu0 0
    %696 = vmatpush1.bf16.msra.mxu0 %v494
    %697 = vmatprep.subr.bf16.mxu0 0
    %698 = vmatpush1.bf16.msra.mxu0 %v495
    %699 = vmatprep.subr.bf16.mxu0 0
    %700 = vmatpush1.bf16.msra.mxu0 %v496
    %701 = vmatprep.subr.bf16.mxu0 0
    %702 = vmatpush1.bf16.msra.mxu0 %v497
    %703 = vmatprep.subr.bf16.mxu0 0
    %704 = vmatpush1.bf16.msra.mxu0 %v498
    %705 = vmatprep.subr.bf16.mxu0 0
    %706 = vmatpush1.bf16.msra.mxu0 %v499
    %707 = vmatprep.subr.bf16.mxu0 0
    %708 = vmatpush1.bf16.msra.mxu0 %v500
    %709 = vmatprep.subr.bf16.mxu0 0
    %710 = vmatpush1.bf16.msra.mxu0 %v501
    %711 = vmatprep.subr.bf16.mxu0 0
    %712 = vmatpush1.bf16.msra.mxu0 %v502
    %713 = vmatprep.subr.bf16.mxu0 0
    %714 = vmatpush1.bf16.msra.mxu0 %v503
    %715 = vmatprep.subr.bf16.mxu0 0
    %716 = vmatpush1.bf16.msra.mxu0 %v504
    %717 = vmatprep.subr.bf16.mxu0 0
    %718 = vmatpush1.bf16.msra.mxu0 %v505
    %719 = vmatprep.subr.bf16.mxu0 0
    %720 = vmatpush1.bf16.msra.mxu0 %v506
    %721 = vmatprep.subr.bf16.mxu0 0
    %722 = vmatpush1.bf16.msra.mxu0 %v507
    %723 = vmatprep.subr.bf16.mxu0 0
    %724 = vmatpush1.bf16.msra.mxu0 %v508
    %725 = vmatprep.mubr.bf16.mxu0 %v53
    %726 = vmatmul.mubr.bf16.gmra.mrb[0].mxu0 %v52
    %v727 = vpop.f32.mrb[0].mxu0
    %v728 = vadd.f32 %v688, %v727
    %v729 = vpop.f32.mrb[0].mxu0
    %v730 = vpop.f32.mrb[0].mxu0
    %v731 = vpop.f32.mrb[0].mxu0
    %732 = vdwg.mxu0
    %v733 = vtanh.pop %v728
    %v734 = vpack.c.bf16 %v733, %v733
    %v735 = vld [vmem:[%s3] sm:$0xff]
    %v736 = vld [vmem:[%s3 + $0x8] sm:$0xff]
    %v737 = vld [vmem:[%s3 + $0x10] sm:$0xff]
    %v738 = vld [vmem:[%s3 + $0x18] sm:$0xff]
    %v739 = vld [vmem:[%s3 + $0x20] sm:$0xf]
    %v740 = vld [vmem:[%s3 + $0x24] sm:$0xff]
    %v741 = vld [vmem:[%s3 + $0x2c] sm:$0xff]
    %v742 = vld [vmem:[%s3 + $0x34] sm:$0xff]
    %v743 = vld [vmem:[%s3 + $0x3c] sm:$0xff]
    %v744 = vld [vmem:[%s3 + $0x44] sm:$0xf]
    %v745 = vld [vmem:[%s3 + $0x48] sm:$0xff]
    %v746 = vld [vmem:[%s3 + $0x50] sm:$0xff]
    %v747 = vld [vmem:[%s3 + $0x58] sm:$0xff]
    %v748 = vld [vmem:[%s3 + $0x60] sm:$0xff]
    %v749 = vld [vmem:[%s3 + $0x68] sm:$0xf]
    %v750 = vld [vmem:[%s3 + $0x6c] sm:$0xff]
    %v751 = vld [vmem:[%s3 + $0x74] sm:$0xff]
    %v752 = vld [vmem:[%s3 + $0x7c] sm:$0xff]
    %v753 = vld [vmem:[%s3 + $0x84] sm:$0xff]
    %v754 = vld [vmem:[%s3 + $0x8c] sm:$0xf]
    %v755 = vld [vmem:[%s4] sm:$0xff]
    %v756 = vld [vmem:[%s4 + $0x8] sm:$0x1]
    %v759 = vlaneseq
    %v760 = vshrl.u32 %v759, 7
    %v761 = vsub.s32 0, %v760
    %v762 = vrot.slane %v755, %v761
    %v763 = vlaneseq
    %v764 = vshrl.u32 %v763, 7
    %v765 = vsub.s32 1, %v764
    %v766 = vrot.slane %v755, %v765
    %v767 = vlaneseq
    %v768 = vshrl.u32 %v767, 7
    %v769 = vsub.s32 2, %v768
    %v770 = vrot.slane %v755, %v769
    %v771 = vlaneseq
    %v772 = vshrl.u32 %v771, 7
    %v773 = vsub.s32 3, %v772
    %v774 = vrot.slane %v755, %v773
    %v775 = vlaneseq
    %v776 = vshrl.u32 %v775, 7
    %v777 = vsub.s32 4, %v776
    %v778 = vrot.slane %v755, %v777
    %v779 = vlaneseq
    %v780 = vshrl.u32 %v779, 7
    %v781 = vsub.s32 5, %v780
    %v782 = vrot.slane %v755, %v781
    %v783 = vlaneseq
    %v784 = vshrl.u32 %v783, 7
    %v785 = vsub.s32 6, %v784
    %v786 = vrot.slane %v755, %v785
    %v787 = vlaneseq
    %v788 = vshrl.u32 %v787, 7
    %v789 = vsub.s32 7, %v788
    %v790 = vrot.slane %v755, %v789
    %v791 = vlaneseq
    %v792 = vshrl.u32 %v791, 7
    %v793 = vsub.s32 0, %v792
    %v794 = vrot.slane %v756, %v793
    %v824 = vunpack.c.l.b16 %v735
    %v825 = vunpack.c.h.b16 %v735
    %v826 = vunpack.c.l.b16 %v736
    %v827 = vunpack.c.h.b16 %v736
    %v828 = vunpack.c.l.b16 %v737
    %v829 = vunpack.c.h.b16 %v737
    %v830 = vunpack.c.l.b16 %v738
    %v831 = vunpack.c.h.b16 %v738
    %v832 = vunpack.c.l.b16 %v739
    %v833 = vunpack.c.l.b16 %v740
    %v834 = vunpack.c.h.b16 %v740
    %v835 = vunpack.c.l.b16 %v741
    %v836 = vunpack.c.h.b16 %v741
    %v837 = vunpack.c.l.b16 %v742
    %v838 = vunpack.c.h.b16 %v742
    %v839 = vunpack.c.l.b16 %v743
    %v840 = vunpack.c.h.b16 %v743
    %v841 = vunpack.c.l.b16 %v744
    %v842 = vunpack.c.l.b16 %v745
    %v843 = vunpack.c.h.b16 %v745
    %v844 = vunpack.c.l.b16 %v746
    %v845 = vunpack.c.h.b16 %v746
    %v846 = vunpack.c.l.b16 %v747
    %v847 = vunpack.c.h.b16 %v747
    %v848 = vunpack.c.l.b16 %v748
    %v849 = vunpack.c.h.b16 %v748
    %v850 = vunpack.c.l.b16 %v749
    %v851 = vunpack.c.l.b16 %v750
    %v852 = vunpack.c.h.b16 %v750
    %v853 = vunpack.c.l.b16 %v751
    %v854 = vunpack.c.h.b16 %v751
    %v855 = vunpack.c.l.b16 %v752
    %v856 = vunpack.c.h.b16 %v752
    %v857 = vunpack.c.l.b16 %v753
    %v858 = vunpack.c.h.b16 %v753
    %v859 = vunpack.c.l.b16 %v754
    %v860 = vpack.c.b16 %v833, %v824
    %v861 = vpack.c.b16 %v834, %v825
    %v862 = vpack.c.b16 %v835, %v826
    %v863 = vpack.c.b16 %v836, %v827
    %v864 = vpack.c.b16 %v837, %v828
    %v865 = vpack.c.b16 %v838, %v829
    %v866 = vpack.c.b16 %v839, %v830
    %v867 = vpack.c.b16 %v840, %v831
    %v868 = vpack.c.b16 %v841, %v832
    %v869 = vpack.c.b16 %v851, %v842
    %v870 = vpack.c.b16 %v852, %v843
    %v871 = vpack.c.b16 %v853, %v844
    %v872 = vpack.c.b16 %v854, %v845
    %v873 = vpack.c.b16 %v855, %v846
    %v874 = vpack.c.b16 %v856, %v847
    %v875 = vpack.c.b16 %v857, %v848
    %v876 = vpack.c.b16 %v858, %v849
    %v877 = vpack.c.b16 %v859, %v850
    %vm896 = vcmask 261120
    %v898 = vsel %vm896, %v734, 0
    %900 = vmatprep.subr.bf16.mxu0 %v861
    %901 = vmatpush1.bf16.msra.mxu0 %v860
    %902 = vmatprep.subr.bf16.mxu0 %v870
    %903 = vmatpush1.bf16.msra.mxu0 %v869
    %904 = vmatprep.subr.bf16.mxu0 0
    %905 = vmatpush1.bf16.msra.mxu0 0
    %906 = vmatprep.subr.bf16.mxu0 0
    %907 = vmatpush1.bf16.msra.mxu0 0
    %908 = vmatprep.subr.bf16.mxu0 0
    %909 = vmatpush1.bf16.msra.mxu0 0
    %910 = vmatprep.subr.bf16.mxu0 0
    %911 = vmatpush1.bf16.msra.mxu0 0
    %912 = vmatprep.subr.bf16.mxu0 0
    %913 = vmatpush1.bf16.msra.mxu0 0
    %914 = vmatprep.subr.bf16.mxu0 0
    %915 = vmatpush1.bf16.msra.mxu0 0
    %916 = vmatprep.subr.bf16.mxu0 0
    %917 = vmatpush1.bf16.msra.mxu0 0
    %918 = vmatprep.subr.bf16.mxu0 0
    %919 = vmatpush1.bf16.msra.mxu0 0
    %920 = vmatprep.subr.bf16.mxu0 0
    %921 = vmatpush1.bf16.msra.mxu0 0
    %922 = vmatprep.subr.bf16.mxu0 0
    %923 = vmatpush1.bf16.msra.mxu0 0
    %924 = vmatprep.subr.bf16.mxu0 0
    %925 = vmatpush1.bf16.msra.mxu0 0
    %926 = vmatprep.subr.bf16.mxu0 0
    %927 = vmatpush1.bf16.msra.mxu0 0
    %928 = vmatprep.subr.bf16.mxu0 0
    %929 = vmatpush1.bf16.msra.mxu0 0
    %930 = vmatprep.subr.bf16.mxu0 0
    %931 = vmatpush1.bf16.msra.mxu0 0
    %932 = vmatprep.mubr.bf16.mxu0 0
    %933 = vmatmul.mubr.bf16.gmra.mrb[0].mxu0 %v898
    %v934 = vpop.f32.mrb[0].mxu0
    %v935 = vadd.f32 %v762, %v934
    %v936 = vpop.f32.mrb[0].mxu0
    %v937 = vadd.f32 %v766, %v936
    %v938 = vpop.f32.mrb[0].mxu0
    %v939 = vpop.f32.mrb[0].mxu0
    %940 = vdwg.mxu0
    %941 = vmatprep.subr.bf16.mxu0 %v863
    %942 = vmatpush1.bf16.msra.mxu0 %v862
    %943 = vmatprep.subr.bf16.mxu0 %v872
    %944 = vmatpush1.bf16.msra.mxu0 %v871
    %945 = vmatprep.subr.bf16.mxu0 0
    %946 = vmatpush1.bf16.msra.mxu0 0
    %947 = vmatprep.subr.bf16.mxu0 0
    %948 = vmatpush1.bf16.msra.mxu0 0
    %949 = vmatprep.subr.bf16.mxu0 0
    %950 = vmatpush1.bf16.msra.mxu0 0
    %951 = vmatprep.subr.bf16.mxu0 0
    %952 = vmatpush1.bf16.msra.mxu0 0
    %953 = vmatprep.subr.bf16.mxu0 0
    %954 = vmatpush1.bf16.msra.mxu0 0
    %955 = vmatprep.subr.bf16.mxu0 0
    %956 = vmatpush1.bf16.msra.mxu0 0
    %957 = vmatprep.subr.bf16.mxu0 0
    %958 = vmatpush1.bf16.msra.mxu0 0
    %959 = vmatprep.subr.bf16.mxu0 0
    %960 = vmatpush1.bf16.msra.mxu0 0
    %961 = vmatprep.subr.bf16.mxu0 0
    %962 = vmatpush1.bf16.msra.mxu0 0
    %963 = vmatprep.subr.bf16.mxu0 0
    %964 = vmatpush1.bf16.msra.mxu0 0
    %965 = vmatprep.subr.bf16.mxu0 0
    %966 = vmatpush1.bf16.msra.mxu0 0
    %967 = vmatprep.subr.bf16.mxu0 0
    %968 = vmatpush1.bf16.msra.mxu0 0
    %969 = vmatprep.subr.bf16.mxu0 0
    %970 = vmatpush1.bf16.msra.mxu0 0
    %971 = vmatprep.subr.bf16.mxu0 0
    %972 = vmatpush1.bf16.msra.mxu0 0
    %973 = vmatprep.mubr.bf16.mxu0 0
    %974 = vmatmul.mubr.bf16.gmra.mrb[0].mxu0 %v898
    %v975 = vpop.f32.mrb[0].mxu0
    %v976 = vadd.f32 %v770, %v975
    %v977 = vpop.f32.mrb[0].mxu0
    %v978 = vadd.f32 %v774, %v977
    %v979 = vpop.f32.mrb[0].mxu0
    %v980 = vpop.f32.mrb[0].mxu0
    %981 = vdwg.mxu0
    %982 = vmatprep.subr.bf16.mxu0 %v865
    %983 = vmatpush1.bf16.msra.mxu0 %v864
    %984 = vmatprep.subr.bf16.mxu0 %v874
    %985 = vmatpush1.bf16.msra.mxu0 %v873
    %986 = vmatprep.subr.bf16.mxu0 0
    %987 = vmatpush1.bf16.msra.mxu0 0
    %988 = vmatprep.subr.bf16.mxu0 0
    %989 = vmatpush1.bf16.msra.mxu0 0
    %990 = vmatprep.subr.bf16.mxu0 0
    %991 = vmatpush1.bf16.msra.mxu0 0
    %992 = vmatprep.subr.bf16.mxu0 0
    %993 = vmatpush1.bf16.msra.mxu0 0
    %994 = vmatprep.subr.bf16.mxu0 0
    %995 = vmatpush1.bf16.msra.mxu0 0
    %996 = vmatprep.subr.bf16.mxu0 0
    %997 = vmatpush1.bf16.msra.mxu0 0
    %998 = vmatprep.subr.bf16.mxu0 0
    %999 = vmatpush1.bf16.msra.mxu0 0
    %1000 = vmatprep.subr.bf16.mxu0 0
    %1001 = vmatpush1.bf16.msra.mxu0 0
    %1002 = vmatprep.subr.bf16.mxu0 0
    %1003 = vmatpush1.bf16.msra.mxu0 0
    %1004 = vmatprep.subr.bf16.mxu0 0
    %1005 = vmatpush1.bf16.msra.mxu0 0
    %1006 = vmatprep.subr.bf16.mxu0 0
    %1007 = vmatpush1.bf16.msra.mxu0 0
    %1008 = vmatprep.subr.bf16.mxu0 0
    %1009 = vmatpush1.bf16.msra.mxu0 0
    %1010 = vmatprep.subr.bf16.mxu0 0
    %1011 = vmatpush1.bf16.msra.mxu0 0
    %1012 = vmatprep.subr.bf16.mxu0 0
    %1013 = vmatpush1.bf16.msra.mxu0 0
    %1014 = vmatprep.mubr.bf16.mxu0 0
    %1015 = vmatmul.mubr.bf16.gmra.mrb[0].mxu0 %v898
    %v1016 = vpop.f32.mrb[0].mxu0
    %v1017 = vadd.f32 %v778, %v1016
    %v1018 = vpop.f32.mrb[0].mxu0
    %v1019 = vadd.f32 %v782, %v1018
    %v1020 = vpop.f32.mrb[0].mxu0
    %v1021 = vpop.f32.mrb[0].mxu0
    %1022 = vdwg.mxu0
    %1023 = vmatprep.subr.bf16.mxu0 %v867
    %1024 = vmatpush1.bf16.msra.mxu0 %v866
    %1025 = vmatprep.subr.bf16.mxu0 %v876
    %1026 = vmatpush1.bf16.msra.mxu0 %v875
    %1027 = vmatprep.subr.bf16.mxu0 0
    %1028 = vmatpush1.bf16.msra.mxu0 0
    %1029 = vmatprep.subr.bf16.mxu0 0
    %1030 = vmatpush1.bf16.msra.mxu0 0
    %1031 = vmatprep.subr.bf16.mxu0 0
    %1032 = vmatpush1.bf16.msra.mxu0 0
    %1033 = vmatprep.subr.bf16.mxu0 0
    %1034 = vmatpush1.bf16.msra.mxu0 0
    %1035 = vmatprep.subr.bf16.mxu0 0
    %1036 = vmatpush1.bf16.msra.mxu0 0
    %1037 = vmatprep.subr.bf16.mxu0 0
    %1038 = vmatpush1.bf16.msra.mxu0 0
    %1039 = vmatprep.subr.bf16.mxu0 0
    %1040 = vmatpush1.bf16.msra.mxu0 0
    %1041 = vmatprep.subr.bf16.mxu0 0
    %1042 = vmatpush1.bf16.msra.mxu0 0
    %1043 = vmatprep.subr.bf16.mxu0 0
    %1044 = vmatpush1.bf16.msra.mxu0 0
    %1045 = vmatprep.subr.bf16.mxu0 0
    %1046 = vmatpush1.bf16.msra.mxu0 0
    %1047 = vmatprep.subr.bf16.mxu0 0
    %1048 = vmatpush1.bf16.msra.mxu0 0
    %1049 = vmatprep.subr.bf16.mxu0 0
    %1050 = vmatpush1.bf16.msra.mxu0 0
    %1051 = vmatprep.subr.bf16.mxu0 0
    %1052 = vmatpush1.bf16.msra.mxu0 0
    %1053 = vmatprep.subr.bf16.mxu0 0
    %1054 = vmatpush1.bf16.msra.mxu0 0
    %1055 = vmatprep.mubr.bf16.mxu0 0
    %1056 = vmatmul.mubr.bf16.gmra.mrb[0].mxu0 %v898
    %v1057 = vpop.f32.mrb[0].mxu0
    %v1058 = vadd.f32 %v786, %v1057
    %v1059 = vpop.f32.mrb[0].mxu0
    %v1060 = vadd.f32 %v790, %v1059
    %v1061 = vpop.f32.mrb[0].mxu0
    %v1062 = vpop.f32.mrb[0].mxu0
    %1063 = vdwg.mxu0
    %1064 = vmatprep.subr.bf16.mxu0 0
    %1065 = vmatpush1.bf16.msra.mxu0 %v868
    %1066 = vmatprep.subr.bf16.mxu0 0
    %1067 = vmatpush1.bf16.msra.mxu0 %v877
    %1068 = vmatprep.subr.bf16.mxu0 0
    %1069 = vmatpush1.bf16.msra.mxu0 0
    %1070 = vmatprep.subr.bf16.mxu0 0
    %1071 = vmatpush1.bf16.msra.mxu0 0
    %1072 = vmatprep.subr.bf16.mxu0 0
    %1073 = vmatpush1.bf16.msra.mxu0 0
    %1074 = vmatprep.subr.bf16.mxu0 0
    %1075 = vmatpush1.bf16.msra.mxu0 0
    %1076 = vmatprep.subr.bf16.mxu0 0
    %1077 = vmatpush1.bf16.msra.mxu0 0
    %1078 = vmatprep.subr.bf16.mxu0 0
    %1079 = vmatpush1.bf16.msra.mxu0 0
    %1080 = vmatprep.subr.bf16.mxu0 0
    %1081 = vmatpush1.bf16.msra.mxu0 0
    %1082 = vmatprep.subr.bf16.mxu0 0
    %1083 = vmatpush1.bf16.msra.mxu0 0
    %1084 = vmatprep.subr.bf16.mxu0 0
    %1085 = vmatpush1.bf16.msra.mxu0 0
    %1086 = vmatprep.subr.bf16.mxu0 0
    %1087 = vmatpush1.bf16.msra.mxu0 0
    %1088 = vmatprep.subr.bf16.mxu0 0
    %1089 = vmatpush1.bf16.msra.mxu0 0
    %1090 = vmatprep.subr.bf16.mxu0 0
    %1091 = vmatpush1.bf16.msra.mxu0 0
    %1092 = vmatprep.subr.bf16.mxu0 0
    %1093 = vmatpush1.bf16.msra.mxu0 0
    %1094 = vmatprep.subr.bf16.mxu0 0
    %1095 = vmatpush1.bf16.msra.mxu0 0
    %1096 = vmatprep.mubr.bf16.mxu0 0
    %1097 = vmatmul.mubr.bf16.gmra.mrb[0].mxu0 %v898
    %v1098 = vpop.f32.mrb[0].mxu0
    %v1099 = vadd.f32 %v794, %v1098
    %v1100 = vpop.f32.mrb[0].mxu0
    %v1101 = vpop.f32.mrb[0].mxu0
    %v1102 = vpop.f32.mrb[0].mxu0
    %1103 = vdwg.mxu0
    %v1104 = vsub.f32 %v38, %v935
    %v1105 = vsub.f32 %v39, %v937
    %v1106 = vsub.f32 %v40, %v976
    %v1107 = vsub.f32 %v41, %v978
    %v1108 = vsub.f32 %v42, %v1017
    %v1109 = vsub.f32 %v43, %v1019
    %v1110 = vsub.f32 %v44, %v1058
    %v1111 = vsub.f32 %v45, %v1060
    %v1112 = vmul.f32 %v1104, %v1104
    %v1113 = vmul.f32 %v1105, %v1105
    %v1114 = vmul.f32 %v1106, %v1106
    %v1115 = vmul.f32 %v1107, %v1107
    %v1116 = vmul.f32 %v1108, %v1108
    %v1117 = vmul.f32 %v1109, %v1109
    %v1118 = vmul.f32 %v1110, %v1110
    %v1119 = vmul.f32 %v1111, %v1111
    %v1120 = vadd.f32 %v1112, %v1113
    %v1121 = vadd.f32 %v1120, %v1114
    %v1122 = vadd.f32 %v1121, %v1115
    %v1123 = vadd.f32 %v1122, %v1116
    %v1124 = vadd.f32 %v1123, %v1117
    %v1125 = vadd.f32 %v1124, %v1118
    %v1126 = vadd.f32 %v1125, %v1119
    %1127 = vadd.xlane.f32.xlu0 %v1126
    %v1128 = vpop.xlane.xlu0 %1127
    %v1129 = vmul.f32 %v1128, 0.0009765625
    %s1130 = sld [smem:[#allocation2]]
    %s1131 = sld [smem:[#allocation2 + $0x1]]
    %s1132 = sld [smem:[#allocation2 + $0x2]]
    %s1133 = sld [smem:[#allocation2 + $0x3]]
    %v1134 = vmul.f32 %v1099, %v1099
    %v1135 = vsel %vm896, %v1134, 0.0
    %1136 = vadd.xlane.f32.xlu0 %v1135
    %v1137 = vpop.xlane.xlu0 %1136
    %v1138 = vmul.f32 %v1137, 0.5
    %s1139 = smul.f32 %s1133, 16.0
    %v1140 = vstv %s1139
    %v1141 = vadd.f32 %v1138, %v1140
    %v1142 = vstv %s1130
    %v1143 = vsub.f32 %v1141, %v1142
    %v1144 = vstv %s1131
    %v1145 = vmul.f32 %v1144, %v1129
    %v1146 = vstv %s1132
    %v1147 = vmul.f32 %v1146, %v1143
    %v1148 = vadd.f32 %v1145, %v1147
    %v1149 = vlaneseq
    %v1150 = vand.u32 %v1149, 127
    %vm1151 = vcmp.eq.s32.totalorder %v1150, 0
    %vm1152 = vcmp.eq.s32.totalorder %v1150, 1
    %vm1153 = vcmp.eq.s32.totalorder %v1150, 2
    %v1154 = vsel %vm1153, %v1148, 0.0
    %v1155 = vsel %vm1152, %v1143, %v1154
    %v1156 = vsel %vm1151, %v1129, %v1155
    %vm1157 = vcmask 64512
    %1158 = vst.msk [vmem:[#allocation5] sm:$0xff] %vm1157, %v1156
    // Predicated region
    $region30: #{tpu_custom_call.1} parent=1 // pred_check
      _
    $region31: #{tpu_custom_call.1} parent=1 // pred_check_branch
      %1160 = sbr.rel (0) target = $region33
    $region32: #{tpu_custom_call.1} parent=1 // pred_region
      %s1162 = ssub.s32 128, 128
      %1163 = vsyncadd [#allocation3], %s1162
      %s1165 = sshll.u32 [#allocation5], 4
      %s1166 = int_to_ptr.vmem [resolvable:$true] %s1165
      %1168 = dma.vmem_to_hbm [thread:$0]  %s1166, 128, %s6, [#allocation3]
    $region33: #{tpu_custom_call.1} parent=1 // pred_fallthru
      _
    // Predicated region
    $region34: #{tpu_custom_call.1} parent=1 // pred_check
      _
    $region35: #{tpu_custom_call.1} parent=1 // pred_check_branch
      %1170 = sbr.rel (0) target = $region37
    $region36: #{tpu_custom_call.1} parent=1 // pred_region
      %1171 = dma.done [#allocation3], 128
    $region37: #{tpu_custom_call.1} parent=1 // pred_fallthru
      _
    %1172 = vsyncpa [#allocation3], 1
    %1173 = vsyncpa [#allocation4], 1

</llo_original>
